<compile_context>
chip_gen: v7x
topology: tpu7x:2x2x1
jax: 0.10.0
libtpu: 0.0.40
codegen_flags: <defaults>
</compile_context>

<pallas_src>
from functools import partial

import jax
import jax.numpy as jnp
from jax.experimental import pallas as pl
from jax.experimental.pallas import tpu as pltpu

ACTION_DIM = 4      # synthetic env: Box(-1, 1, shape=(4,))
STATE_DIM = 32      # synthetic observation size (ignored by the agent)
ACT_LOW = -1.0
ACT_HIGH = 1.0
LANE = 128          # keep output lane-dense (one action per 128-lane row)
MAX_BLOCK_ROWS = 512


def _round_up(x, m):
    return ((x + m - 1) // m) * m


def uniform_action_kernel(bits_ref, out_ref):
    """bits (uint32) -> uniform action in [ACT_LOW, ACT_HIGH).

    Uses the mantissa bit-trick: (bits >> 9) | 0x3F800000 bitcast to f32 lies
    in [1, 2); subtract 1.0 to get u in [0, 1). Pure VPU bit ops, no
    int->float convert.
    """
    bits = bits_ref[...]                                   # (block_rows, 128) uint32
    mant = (bits >> jnp.uint32(9)) | jnp.uint32(0x3F800000)
    u = jax.lax.bitcast_convert_type(mant, jnp.float32) - jnp.float32(1.0)
    # act_low / act_high are compile-time constants (folded at trace time).
    out_ref[...] = jnp.float32(ACT_LOW) + u * jnp.float32(ACT_HIGH - ACT_LOW)


@partial(jax.jit, static_argnames=("num_actions",))
def sample_actions(key, num_actions):
    """Sample `num_actions` actions in one pallas_call (amortizes launch cost)."""
    block_rows = min(_round_up(num_actions, 8), MAX_BLOCK_ROWS)
    rows = _round_up(num_actions, block_rows)
    grid = (rows // block_rows,)

    # Device-side random bits (fused by XLA under jit); one 128-lane row/action.
    bits = jax.random.bits(key, (rows, LANE), dtype=jnp.uint32)

    slab = pl.pallas_call(
        uniform_action_kernel,
        out_shape=jax.ShapeDtypeStruct((rows, LANE), jnp.float32),
        grid=grid,
        in_specs=[pl.BlockSpec((block_rows, LANE), lambda i: (i, 0))],
        out_specs=pl.BlockSpec((block_rows, LANE), lambda i: (i, 0)),
        compiler_params=pltpu.CompilerParams(
            dimension_semantics=("parallel",)),  # v7x: shard rows across 2 TCs
    )(bits)

    # env.sample_action() gives (ACTION_DIM,) vectors; slice lane-dense slab.
    return slab[:num_actions, :ACTION_DIM]


def random_agent_forward(state, key):
    """Pallas equivalent of RandomAgent.forward(state) -> env.sample_action()."""
    del state  # RandomAgent ignores the observation entirely.
    return sample_actions(key, 1)[0]


if __name__ == "__main__":
    key = jax.random.PRNGKey(0)
    state_key, a_key, b_key, batch_key = jax.random.split(key, 4)

    # deterministic example observation (shape consistent with a small env)
    state = jax.random.normal(state_key, (1, STATE_DIM), dtype=jnp.float32)

    action = jax.block_until_ready(random_agent_forward(state, a_key))
    assert action.shape == (ACTION_DIM,), action.shape
    assert action.dtype == jnp.float32
    assert bool(jnp.all(action >= ACT_LOW)) and bool(jnp.all(action < ACT_HIGH))

    # different keys -> different actions (sanity that sampling is live)
    action2 = jax.block_until_ready(random_agent_forward(state, b_key))
    assert not bool(jnp.all(action == action2))

    # batched rollout-style sampling: many actions per kernel launch
    batch = jax.block_until_ready(sample_actions(batch_key, 64))
    assert batch.shape == (64, ACTION_DIM), batch.shape
    assert bool(jnp.all(batch >= ACT_LOW)) and bool(jnp.all(batch < ACT_HIGH))

    print("KERNEL_OK")
</pallas_src>

<mosaic_0001>
module attributes {stable_mosaic.version = 11 : i64} {
  func.func @uniform_action_kernel(%arg0: i32, %arg1: memref<8x128xi32, #tpu.memory_space<vmem>>, %arg2: memref<8x128xf32, #tpu.memory_space<vmem>>) attributes {dimension_semantics = [#tpu.dimension_semantics<parallel>], iteration_bounds = array<i64: 1>, scalar_prefetch = 0 : i64, scratch_operands = 0 : i64, tpu.core_type = #tpu.core_type<tc>, window_params = [{transform_indices = @transform_0, window_bounds = array<i64: 8, 128>}, {transform_indices = @transform_1, window_bounds = array<i64: 8, 128>}]} {
    %c0 = arith.constant 0 : index
    %c0_0 = arith.constant 0 : index
    %0 = vector.load %arg1[%c0, %c0_0] : memref<8x128xi32, #tpu.memory_space<vmem>>, vector<8x128xi32>
    %c9_i32 = arith.constant 9 : i32
    %1 = vector.broadcast %c9_i32 : i32 to vector<8x128xi32>
    %2 = arith.shrui %0, %1 : vector<8x128xi32>
    %c1065353216_i32 = arith.constant 1065353216 : i32
    %3 = vector.broadcast %c1065353216_i32 : i32 to vector<8x128xi32>
    %4 = arith.ori %2, %3 : vector<8x128xi32>
    %5 = tpu.bitcast %4 : vector<8x128xi32> -> vector<8x128xf32>
    %cst = arith.constant 1.000000e+00 : f32
    %6 = vector.broadcast %cst : f32 to vector<8x128xf32>
    %7 = arith.subf %5, %6 : vector<8x128xf32>
    %cst_1 = arith.constant 2.000000e+00 : f32
    %8 = vector.broadcast %cst_1 : f32 to vector<8x128xf32>
    %9 = arith.mulf %7, %8 : vector<8x128xf32>
    %cst_2 = arith.constant -1.000000e+00 : f32
    %10 = vector.broadcast %cst_2 : f32 to vector<8x128xf32>
    %11 = arith.addf %10, %9 : vector<8x128xf32>
    %c0_3 = arith.constant 0 : index
    %c0_4 = arith.constant 0 : index
    %12 = vector.load %arg2[%c0_3, %c0_4] : memref<8x128xf32, #tpu.memory_space<vmem>>, vector<8x128xf32>
    tpu.vector_store %arg2[%c0_3, %c0_4], %11 {strides = array<i32>} : memref<8x128xf32, #tpu.memory_space<vmem>>, vector<8x128xf32>,
    return
  }
  func.func @transform_0(%arg0: i32) -> (i32, i32) {
    %c0_i32 = arith.constant 0 : i32
    %c0_i32_0 = arith.constant 0 : i32
    return %arg0, %c0_i32 : i32, i32
  }
  func.func @transform_1(%arg0: i32) -> (i32, i32) {
    %c0_i32 = arith.constant 0 : i32
    %c0_i32_0 = arith.constant 0 : i32
    return %arg0, %c0_i32 : i32, i32
  }
}

</mosaic_0001>

<llo_original>
// kernel: sample_actions.1
$region0: #{sample_actions.1}
  #allocation0 [shape = 'u32[]', space=smem, size = 0x4, offset = 0x4, fixed_abs, tag = 'smem constant byte address 0x4 - core index']
  #allocation1 [shape = 'u32[144,128]{1,0:T(1,128)}', space=vmem, size = 0x12000, scoped, tag = 'internal scratch']
  %s0 = inlined_call_operand.vmem [shape: u32[8,128], index: 0, kind: input, shape index: {}]
  %s1 = inlined_call_operand.vmem [shape: f32[8,128], index: 1, kind: output, shape index: {}]
  %s2 = sld [smem:[#allocation0]]
  $region14: #{sample_actions.1} parent=0
    _
  %s4 = ssub.s32 1, %s2
  %s5 = scalar_select 0, %s4, %s2
  // Predicated region
  $region2: #{sample_actions.1} parent=0 // pred_check
    _
  $region3: #{sample_actions.1} parent=0 // pred_check_branch
    %7 = sbr.rel (0) target = $region5
  $region4: #{sample_actions.1} parent=0 // pred_region
    _
  $region5: #{sample_actions.1} parent=0 // pred_fallthru
    _
  %v8 = vld [vmem:[%s0] sm:$0xff]
  %v9 = vshrl.u32 %v8, 9
  %v10 = vor.u32 %v9, 1065353216
  %v12 = vsub.f32 %v10, 1.0
  %v13 = vmul.f32 %v12, 2.0
  %v14 = vadd.f32 %v13, -1.0
  %15 = vst [vmem:[%s1] sm:$0xff] %v14
  // Predicated region
  $region6: #{sample_actions.1} parent=0 // pred_check
    _
  $region7: #{sample_actions.1} parent=0 // pred_check_branch
    %17 = sbr.rel (0) target = $region9
  $region8: #{sample_actions.1} parent=0 // pred_region
    _
  $region9: #{sample_actions.1} parent=0 // pred_fallthru
    _
  // Predicated region
  $region10: #{sample_actions.1} parent=0 // pred_check
    _
  $region11: #{sample_actions.1} parent=0 // pred_check_branch
    %19 = sbr.rel (0) target = $region13
  $region12: #{sample_actions.1} parent=0 // pred_region
    _
  $region13: #{sample_actions.1} parent=0 // pred_fallthru
    _

</llo_original>
